<compile_context>
chip_gen: v7x
topology: tpu7x:2x2x1
jax: 0.10.0
libtpu: 0.0.40
codegen_flags: <defaults>
</compile_context>

<pallas_src>
import jax
import jax.numpy as jnp
from jax.experimental import pallas as pl
from jax.experimental.pallas import tpu as pltpu

NUM_CLASSES = 2       # fc1 out_features
K_RAW = 28 * 28       # flattened 1x28x28 image
TM_MAX = 1024         # max batch-tile rows


def cnn_forward_kernel(x_ref, w_ref, b_ref, o_ref):
    # x_ref: (TM, 784) f32 flattened images
    # w_ref: (784, 2)  f32 folded conv1@fc1 weight
    # b_ref: (1, 2)    f32 folded bias
    # o_ref: (TM, 2)   f32 log-probabilities
    z = jnp.dot(x_ref[...], w_ref[...], preferred_element_type=jnp.float32)
    z = z + b_ref[...]
    z = jnp.maximum(z, 0.0)                        # relu (after fc1, as in the module)
    m = jnp.max(z, axis=-1, keepdims=True)         # log_softmax over the 2 classes
    e = jnp.exp(z - m)
    lse = jnp.log(jnp.sum(e, axis=-1, keepdims=True)) + m
    o_ref[...] = z - lse


def prepare_params(conv_w, conv_b, fc_w, fc_b):
    """One-time exact weight folding (hoisted out of the hot path).

    z = x_flat @ (W1f.T @ W2.T) + (b1 @ W2.T + b2)
    """
    w1f = conv_w.reshape(conv_w.shape[0], -1).astype(jnp.float32)       # (20, 784)
    w2 = fc_w.astype(jnp.float32)                                        # (2, 20)
    w12 = w1f.T @ w2.T                                                   # (784, 2)
    b12 = conv_b.astype(jnp.float32) @ w2.T + fc_b.astype(jnp.float32)   # (2,)
    return w12, b12.reshape(1, NUM_CLASSES)


def _round_up(a, b):
    return ((a + b - 1) // b) * b


@jax.jit
def cnn_model_forward(x_nchw, w12, b12):
    """x_nchw: (N, 1, 28, 28) float32. Returns (N, 2) log-probabilities."""
    N = x_nchw.shape[0]
    x2d = x_nchw.reshape(N, K_RAW)            # contiguous reshape: no copy

    # Batch tile: large enough to amortize per-grid-step overhead, capped so
    # the grid keeps >= 2 steps whenever N > 8 (v7x megacore sharding).
    if N <= 8:
        TM = 8
    else:
        TM = max(8, min(TM_MAX, _round_up((N + 1) // 2, 8)))
    grid_n = (N + TM - 1) // TM               # ragged tail handled by Pallas masking

    cost = pl.CostEstimate(
        flops=2 * N * K_RAW * NUM_CLASSES,
        bytes_accessed=(N * K_RAW * 4               # x (f32, read once)
                        + K_RAW * NUM_CLASSES * 4   # folded weight
                        + NUM_CLASSES * 4           # folded bias
                        + N * NUM_CLASSES * 4),     # narrow output
        transcendentals=N * NUM_CLASSES,
    )

    return pl.pallas_call(
        cnn_forward_kernel,
        out_shape=jax.ShapeDtypeStruct((N, NUM_CLASSES), jnp.float32),
        grid=(grid_n,),
        in_specs=[
            pl.BlockSpec((TM, K_RAW), lambda i: (i, 0)),
            pl.BlockSpec((K_RAW, NUM_CLASSES), lambda i: (0, 0)),
            pl.BlockSpec((1, NUM_CLASSES), lambda i: (0, 0)),
        ],
        out_specs=pl.BlockSpec((TM, NUM_CLASSES), lambda i: (i, 0)),
        compiler_params=pltpu.CompilerParams(
            dimension_semantics=("parallel",)),
        cost_estimate=cost,
    )(x2d, w12, b12)


def init_params(key):
    """Deterministic parameter init matching the PyTorch module's shapes."""
    k1, k2, k3, k4 = jax.random.split(key, 4)
    # conv1: Conv2d(1, 20, kernel_size=28) -> weight (20,1,28,28), bias (20,)
    fan_in_conv = 1 * 28 * 28
    bound_c = 1.0 / jnp.sqrt(fan_in_conv)
    conv_w = jax.random.uniform(k1, (20, 1, 28, 28), jnp.float32, -bound_c, bound_c)
    conv_b = jax.random.uniform(k2, (20,), jnp.float32, -bound_c, bound_c)
    # fc1: Linear(20, 2) -> weight (2,20), bias (2,)
    bound_f = 1.0 / jnp.sqrt(20.0)
    fc_w = jax.random.uniform(k3, (2, 20), jnp.float32, -bound_f, bound_f)
    fc_b = jax.random.uniform(k4, (2,), jnp.float32, -bound_f, bound_f)
    return conv_w, conv_b, fc_w, fc_b


if __name__ == "__main__":
    key = jax.random.PRNGKey(0)
    kx, kp = jax.random.split(key)

    # Input shape fixed by the module: kernel_size=28 + fc1(in=20) imply a
    # single-channel 28x28 image.  Small batch of 16 -> TM=8, 2 grid steps.
    N_DEMO = 16
    x = jax.random.normal(kx, (N_DEMO, 1, 28, 28), dtype=jnp.float32)
    conv_w, conv_b, fc_w, fc_b = init_params(kp)

    # Weight folding happens ONCE, outside the per-call path.
    w12, b12 = prepare_params(conv_w, conv_b, fc_w, fc_b)

    out = cnn_model_forward(x, w12, b12)
    out = jax.block_until_ready(out)

    # Pure-JAX f32 reference of the original (unfolded) math.  Tolerance
    # allows for MXU matmul rounding; typical agreement is much tighter.
    ref_h = x.reshape(N_DEMO, -1) @ conv_w.reshape(20, -1).T + conv_b
    ref_z = jnp.maximum(ref_h @ fc_w.T + fc_b, 0.0)
    ref = jax.nn.log_softmax(ref_z, axis=1)
    assert out.shape == (N_DEMO, NUM_CLASSES)
    assert jnp.allclose(out, ref, atol=2e-2), "mismatch vs reference"

    # TODO(synk): comet-ml logging, matplotlib filter plots (plot_conv_filters),
    # set_conv_filters host-side weight copy, the unused `epoch` argument, and
    # .cuda() calls in the original module are host/IO glue with no kernel
    # equivalent.
    print("KERNEL_OK")
</pallas_src>

<mosaic_0001>
module attributes {stable_mosaic.version = 11 : i64} {
  func.func @cnn_forward_kernel(%arg0: i32, %arg1: memref<8x784xf32, #tpu.memory_space<vmem>>, %arg2: memref<784x2xf32, #tpu.memory_space<vmem>>, %arg3: memref<1x2xf32, #tpu.memory_space<vmem>>, %arg4: memref<8x2xf32, #tpu.memory_space<vmem>>) attributes {dimension_semantics = [#tpu.dimension_semantics<parallel>], iteration_bounds = array<i64: 2>, scalar_prefetch = 0 : i64, scratch_operands = 0 : i64, tpu.core_type = #tpu.core_type<tc>, window_params = [{transform_indices = @transform_0, window_bounds = array<i64: 8, 784>}, {pipeline_mode = #tpu.pipeline_mode<synchronous>, transform_indices = @transform_1, window_bounds = array<i64: 784, 2>}, {pipeline_mode = #tpu.pipeline_mode<synchronous>, transform_indices = @transform_2, window_bounds = array<i64: 1, 2>}, {transform_indices = @transform_3, window_bounds = array<i64: 8, 2>}]} {
    %c0 = arith.constant 0 : index
    %c0_0 = arith.constant 0 : index
    %0 = vector.load %arg1[%c0, %c0_0] : memref<8x784xf32, #tpu.memory_space<vmem>>, vector<8x784xf32>
    %c0_1 = arith.constant 0 : index
    %c0_2 = arith.constant 0 : index
    %1 = vector.load %arg2[%c0_1, %c0_2] : memref<784x2xf32, #tpu.memory_space<vmem>>, vector<784x2xf32>
    %cst = arith.constant dense<0.000000e+00> : vector<8x2xf32>
    %2 = tpu.matmul %0, %1, %cst {dimension_numbers = #tpu.dot_dimension_numbers<[1], [0], [0], [1], [0, 0, 1, 1], [], []>} : vector<8x784xf32>, vector<784x2xf32>, vector<8x2xf32> -> vector<8x2xf32>
    %c0_3 = arith.constant 0 : index
    %c0_4 = arith.constant 0 : index
    %3 = vector.load %arg3[%c0_3, %c0_4] : memref<1x2xf32, #tpu.memory_space<vmem>>, vector<1x2xf32>
    %4 = vector.broadcast %3 : vector<1x2xf32> to vector<8x2xf32>
    %5 = arith.addf %2, %4 : vector<8x2xf32>
    %cst_5 = arith.constant 0.000000e+00 : f32
    %6 = vector.broadcast %cst_5 : f32 to vector<8x2xf32>
    %7 = arith.maximumf %5, %6 : vector<8x2xf32>
    %cst_6 = arith.constant dense<0xFF800000> : vector<8xf32>
    %8 = vector.multi_reduction <maximumf>, %7, %cst_6 [1] : vector<8x2xf32> to vector<8xf32>
    %9 = vector.shape_cast %8 : vector<8xf32> to vector<8x1xf32>
    %10 = vector.broadcast %9 : vector<8x1xf32> to vector<8x2xf32>
    %11 = arith.subf %7, %10 : vector<8x2xf32>
    %12 = math.exp %11 : vector<8x2xf32>
    %cst_7 = arith.constant dense<0.000000e+00> : vector<8xf32>
    %13 = vector.multi_reduction <add>, %12, %cst_7 [1] : vector<8x2xf32> to vector<8xf32>
    %14 = vector.shape_cast %13 : vector<8xf32> to vector<8x1xf32>
    %15 = math.log %14 : vector<8x1xf32>
    %16 = arith.addf %15, %9 : vector<8x1xf32>
    %17 = vector.broadcast %16 : vector<8x1xf32> to vector<8x2xf32>
    %18 = arith.subf %7, %17 : vector<8x2xf32>
    %c0_8 = arith.constant 0 : index
    %c0_9 = arith.constant 0 : index
    %19 = vector.load %arg4[%c0_8, %c0_9] : memref<8x2xf32, #tpu.memory_space<vmem>>, vector<8x2xf32>
    tpu.vector_store %arg4[%c0_8, %c0_9], %18 {strides = array<i32>} : memref<8x2xf32, #tpu.memory_space<vmem>>, vector<8x2xf32>,
    return
  }
  func.func @transform_0(%arg0: i32) -> (i32, i32) {
    %c0_i32 = arith.constant 0 : i32
    %c0_i32_0 = arith.constant 0 : i32
    return %arg0, %c0_i32 : i32, i32
  }
  func.func @transform_1(%arg0: i32) -> (i32, i32) {
    %c0_i32 = arith.constant 0 : i32
    %c0_i32_0 = arith.constant 0 : i32
    %c0_i32_1 = arith.constant 0 : i32
    return %c0_i32, %c0_i32_0 : i32, i32
  }
  func.func @transform_2(%arg0: i32) -> (i32, i32) {
    %c0_i32 = arith.constant 0 : i32
    %c0_i32_0 = arith.constant 0 : i32
    %c0_i32_1 = arith.constant 0 : i32
    return %c0_i32, %c0_i32_0 : i32, i32
  }
  func.func @transform_3(%arg0: i32) -> (i32, i32) {
    %c0_i32 = arith.constant 0 : i32
    %c0_i32_0 = arith.constant 0 : i32
    return %arg0, %c0_i32 : i32, i32
  }
}

</mosaic_0001>

<llo_original>
// kernel: cnn_model_forward.1
$region0: #{cnn_model_forward.1}
  #allocation0 [shape = 'u32[]', space=smem, size = 0x4, offset = 0x4, fixed_abs, tag = 'smem constant byte address 0x4 - core index']
  #allocation1 [shape = 'u32[144,128]{1,0:T(1,128)}', space=vmem, size = 0x12000, scoped, tag = 'internal scratch']
  %s0 = inlined_call_operand.vmem [shape: f32[16,784], index: 0, kind: input, shape index: {}]
  %s1 = inlined_call_operand.vmem [shape: f32[784,2], index: 1, kind: input, shape index: {}]
  %s2 = inlined_call_operand.vmem [shape: f32[1,2], index: 2, kind: input, shape index: {}]
  %s3 = inlined_call_operand.vmem [shape: f32[16,2], index: 3, kind: output, shape index: {}]
  %s4 = sld [smem:[#allocation0]]
  $region45: #{cnn_model_forward.1} parent=0
    _
  %s6 = ssub.s32 1, %s4
  %s7 = scalar_select 0, %s6, %s4
  loop: start=0, step=1, limit=4
  $region2: #{cnn_model_forward.1} parent=0 // loop_pre_header
    _
  $region3: #{cnn_model_forward.1} parent=0 // loop_header
    %s9 = sphi 0, %s13
    %p10 = scmp.ge.s32.totalorder %s9, 4
    %s19 = sphi 0, %s21
    %s22 = sphi 0, %s19
    %s23 = sphi 0, %s22
    %s39 = sphi 0, %s23
    %s43 = sphi 0, %s43
    %s45 = sphi 0, %s43
    %s46 = sphi 0, %s45
    %s60 = sphi 0, %s46
    %s64 = sphi 0, %s64
    %s66 = sphi 0, %s64
    %s67 = sphi 0, %s66
    %s81 = sphi 0, %s67
    %s87 = sphi 0, %s89
    %s90 = sphi 0, %s87
    %s91 = sphi 0, %s90
    %s107 = sphi 0, %s91
  $region4: #{cnn_model_forward.1} parent=0 // loop_header_branch
    %12 = sbr.rel (%p10) target = $region8
  $region5: #{cnn_model_forward.1} parent=0 // loop_body
    %s14 = ssub.s32 %s9, 1
    %s15 = ssub.s32 %s9, 2
    %s16 = sadd.s32 %s9, 1
    %s17 = ssub.s32 %s9, %s16
    %p18 = scmp.eq.s32.totalorder %s17, 0
    %s20 = sadd.s32 %s19, 1
    %s21 = scalar_select %p18, %s19, %s20
    %p24 = pneg %p18
    %p25 = scmp.eq.s32.totalorder %s9, 1
    %p26 = por %p24, %p25
    %p27 = scmp.ne.s32.totalorder %s19, %s22
    %p28 = scmp.eq.s32.totalorder %s9, 0
    %p29 = por %p27, %p28
    %p30 = scmp.ne.s32.totalorder %s19, %s22
    %p31 = scmp.eq.s32.totalorder %s14, 1
    %p32 = por %p30, %p31
    %p33 = scmp.ne.s32.totalorder %s22, %s23
    %p34 = scmp.eq.s32.totalorder %s14, 0
    %p35 = por %p33, %p34
    %p36 = scmp.ne.s32.totalorder %s22, %s23
    %p37 = scmp.eq.s32.totalorder %s15, 1
    %p38 = por %p36, %p37
    %p40 = scmp.ne.s32.totalorder %s23, %s39
    %p41 = scmp.eq.s32.totalorder %s15, 0
    %p42 = por %p40, %p41
    %s44 = sadd.s32 %s43, 1
    %p47 = scmp.eq.s32.totalorder %s9, 1
    %p48 = scmp.ne.s32.totalorder %s43, %s45
    %p49 = scmp.eq.s32.totalorder %s9, 0
    %p50 = por %p48, %p49
    %p51 = scmp.ne.s32.totalorder %s43, %s45
    %p52 = scmp.eq.s32.totalorder %s14, 1
    %p53 = por %p51, %p52
    %p54 = scmp.ne.s32.totalorder %s45, %s46
    %p55 = scmp.eq.s32.totalorder %s14, 0
    %p56 = por %p54, %p55
    %p57 = scmp.ne.s32.totalorder %s45, %s46
    %p58 = scmp.eq.s32.totalorder %s15, 1
    %p59 = por %p57, %p58
    %p61 = scmp.ne.s32.totalorder %s46, %s60
    %p62 = scmp.eq.s32.totalorder %s15, 0
    %p63 = por %p61, %p62
    %s65 = sadd.s32 %s64, 1
    %p68 = scmp.eq.s32.totalorder %s9, 1
    %p69 = scmp.ne.s32.totalorder %s64, %s66
    %p70 = scmp.eq.s32.totalorder %s9, 0
    %p71 = por %p69, %p70
    %p72 = scmp.ne.s32.totalorder %s64, %s66
    %p73 = scmp.eq.s32.totalorder %s14, 1
    %p74 = por %p72, %p73
    %p75 = scmp.ne.s32.totalorder %s66, %s67
    %p76 = scmp.eq.s32.totalorder %s14, 0
    %p77 = por %p75, %p76
    %p78 = scmp.ne.s32.totalorder %s66, %s67
    %p79 = scmp.eq.s32.totalorder %s15, 1
    %p80 = por %p78, %p79
    %p82 = scmp.ne.s32.totalorder %s67, %s81
    %p83 = scmp.eq.s32.totalorder %s15, 0
    %p84 = por %p82, %p83
    %s85 = ssub.s32 %s9, %s16
    %p86 = scmp.eq.s32.totalorder %s85, 0
    %s88 = sadd.s32 %s87, 1
    %s89 = scalar_select %p86, %s87, %s88
    %p92 = pneg %p86
    %p93 = scmp.eq.s32.totalorder %s9, 1
    %p94 = por %p92, %p93
    %p95 = scmp.ne.s32.totalorder %s87, %s90
    %p96 = scmp.eq.s32.totalorder %s9, 0
    %p97 = por %p95, %p96
    %p98 = scmp.ne.s32.totalorder %s87, %s90
    %p99 = scmp.eq.s32.totalorder %s14, 1
    %p100 = por %p98, %p99
    %p101 = scmp.ne.s32.totalorder %s90, %s91
    %p102 = scmp.eq.s32.totalorder %s14, 0
    %p103 = por %p101, %p102
    %p104 = scmp.ne.s32.totalorder %s90, %s91
    %p105 = scmp.eq.s32.totalorder %s15, 1
    %p106 = por %p104, %p105
    %p108 = scmp.ne.s32.totalorder %s91, %s107
    %p109 = scmp.eq.s32.totalorder %s15, 0
    %p110 = por %p108, %p109
    %p111 = scmp.le.s32.totalorder 1, %s9
    %p112 = scmp.lt.s32.totalorder %s9, 3
    %p113 = pnand %p111, %p112
    %p114 = pneg %p113
    // Predicated region
    $region9: #{cnn_model_forward.1} parent=5 // pred_check
      _
    $region10: #{cnn_model_forward.1} parent=5 // pred_check_branch
      %116 = sbr.rel (%p113) target = $region12
    $region11: #{cnn_model_forward.1} parent=5 // pred_region
      %s117 = ssub.s32 %s9, 1
      // Predicated region
      $region13: #{cnn_model_forward.1} parent=11 // pred_check
        %p118 = pneg %p56
      $region14: #{cnn_model_forward.1} parent=11 // pred_check_branch
        %120 = sbr.rel (%p118) target = $region16
      $region15: #{cnn_model_forward.1} parent=11 // pred_region
        _
      $region16: #{cnn_model_forward.1} parent=11 // pred_fallthru
        _
      // Predicated region
      $region17: #{cnn_model_forward.1} parent=11 // pred_check
        %p121 = pneg %p77
      $region18: #{cnn_model_forward.1} parent=11 // pred_check_branch
        %123 = sbr.rel (%p121) target = $region20
      $region19: #{cnn_model_forward.1} parent=11 // pred_region
        _
      $region20: #{cnn_model_forward.1} parent=11 // pred_fallthru
        _
    $region12: #{cnn_model_forward.1} parent=5 // pred_fallthru
      _
    %p124 = scmp.lt.s32.totalorder %s9, 2
    // Predicated region
    $region21: #{cnn_model_forward.1} parent=5 // pred_check
      %p125 = pneg %p124
    $region22: #{cnn_model_forward.1} parent=5 // pred_check_branch
      %127 = sbr.rel (%p125) target = $region24
    $region23: #{cnn_model_forward.1} parent=5 // pred_region
      // Predicated region
      $region25: #{cnn_model_forward.1} parent=23 // pred_check
        %p128 = pneg %p29
      $region26: #{cnn_model_forward.1} parent=23 // pred_check_branch
        %130 = sbr.rel (%p128) target = $region28
      $region27: #{cnn_model_forward.1} parent=23 // pred_region
        %p131 = scmp.lt.s32.totalorder %s9, 1
        %s132 = scalar_select %p131, %s9, 1
        %s133 = smul.addr %s132, 7
        %s134 = smul.addr %s133, 8
        %s135 = scalar_lea.vmem %s0, %s134
      $region28: #{cnn_model_forward.1} parent=23 // pred_fallthru
        _
    $region24: #{cnn_model_forward.1} parent=5 // pred_fallthru
      _
    %p136 = scmp.le.s32.totalorder 1, %s9
    %p137 = scmp.lt.s32.totalorder %s9, 3
    %p138 = pnand %p136, %p137
    %p139 = pneg %p138
    // Predicated region
    $region29: #{cnn_model_forward.1} parent=5 // pred_check
      _
    $region30: #{cnn_model_forward.1} parent=5 // pred_check_branch
      %141 = sbr.rel (%p138) target = $region32
    $region31: #{cnn_model_forward.1} parent=5 // pred_region
      %s142 = ssub.s32 %s9, 1
      %p143 = scmp.lt.s32.totalorder %s14, 1
      %s144 = scalar_select %p143, %s14, 1
      %s145 = smul.addr %s144, 7
      %s146 = smul.addr %s145, 8
      %s147 = scalar_lea.vmem %s0, %s146
      %p148 = pneg %p35
      %p149 = pneg %p32
      %p150 = pneg %p56
      %p151 = pneg %p53
      %p152 = pneg %p77
      %p153 = pneg %p74
      %p154 = pneg %p103
      %p155 = pneg %p100
      %p156 = scmp.lt.s32.totalorder %s14, 1
      %s157 = scalar_select %p156, %s14, 1
      %s158 = smul.addr %s157, 8
      %s159 = scalar_lea.vmem %s3, %s158
      %p160 = scmp.lt.s32.totalorder %s14, 1
      %s161 = scalar_select %p160, %s14, 1
      %s162 = smul.addr %s161, 7
      %s163 = smul.addr %s162, 8
      %s164 = scalar_lea.vmem %s0, %s163
      %p165 = scmp.lt.s32.totalorder %s14, 1
      %s166 = scalar_select %p165, %s14, 1
      %s167 = smul.addr %s166, 8
      %s168 = scalar_lea.vmem %s3, %s167
      %v169 = vld [vmem:[%s164] sm:$0xff]
      %v170 = vld [vmem:[%s164 + $0x8] sm:$0xff]
      %v171 = vld [vmem:[%s164 + $0x10] sm:$0xff]
      %v172 = vld [vmem:[%s164 + $0x18] sm:$0xff]
      %v173 = vld [vmem:[%s164 + $0x20] sm:$0xff]
      %v174 = vld [vmem:[%s164 + $0x28] sm:$0xff]
      %v175 = vld [vmem:[%s164 + $0x30] sm:$0xff]
      %v176 = vld [vmem:[%s1] sm:$0xff]
      %v177 = vld [vmem:[%s1 + $0x8] sm:$0xff]
      %v178 = vld [vmem:[%s1 + $0x10] sm:$0xff]
      %v179 = vld [vmem:[%s1 + $0x18] sm:$0xff]
      %v180 = vld [vmem:[%s1 + $0x20] sm:$0xff]
      %v181 = vld [vmem:[%s1 + $0x28] sm:$0xff]
      %v182 = vld [vmem:[%s1 + $0x30] sm:$0xff]
      %v183 = vld [vmem:[%s1 + $0x38] sm:$0xff]
      %v184 = vld [vmem:[%s1 + $0x40] sm:$0xff]
      %v185 = vld [vmem:[%s1 + $0x48] sm:$0xff]
      %v186 = vld [vmem:[%s1 + $0x50] sm:$0xff]
      %v187 = vld [vmem:[%s1 + $0x58] sm:$0xff]
      %v188 = vld [vmem:[%s1 + $0x60] sm:$0xff]
      %v189 = vld [vmem:[%s1 + $0x68] sm:$0xff]
      %v190 = vld [vmem:[%s1 + $0x70] sm:$0xff]
      %v191 = vld [vmem:[%s1 + $0x78] sm:$0xff]
      %v192 = vld [vmem:[%s1 + $0x80] sm:$0xff]
      %v193 = vld [vmem:[%s1 + $0x88] sm:$0xff]
      %v194 = vld [vmem:[%s1 + $0x90] sm:$0xff]
      %v195 = vld [vmem:[%s1 + $0x98] sm:$0xff]
      %v196 = vld [vmem:[%s1 + $0xa0] sm:$0xff]
      %v197 = vld [vmem:[%s1 + $0xa8] sm:$0xff]
      %v198 = vld [vmem:[%s1 + $0xb0] sm:$0xff]
      %v199 = vld [vmem:[%s1 + $0xb8] sm:$0xff]
      %v200 = vld [vmem:[%s1 + $0xc0] sm:$0xff]
      %v201 = vld [vmem:[%s1 + $0xc8] sm:$0xff]
      %v202 = vld [vmem:[%s1 + $0xd0] sm:$0xff]
      %v203 = vld [vmem:[%s1 + $0xd8] sm:$0xff]
      %v204 = vld [vmem:[%s1 + $0xe0] sm:$0xff]
      %v205 = vld [vmem:[%s1 + $0xe8] sm:$0xff]
      %v206 = vld [vmem:[%s1 + $0xf0] sm:$0xff]
      %v207 = vld [vmem:[%s1 + $0xf8] sm:$0xff]
      %v208 = vld [vmem:[%s1 + $0x100] sm:$0xff]
      %v209 = vld [vmem:[%s1 + $0x108] sm:$0xff]
      %v210 = vld [vmem:[%s1 + $0x110] sm:$0xff]
      %v211 = vld [vmem:[%s1 + $0x118] sm:$0xff]
      %v212 = vld [vmem:[%s1 + $0x120] sm:$0xff]
      %v213 = vld [vmem:[%s1 + $0x128] sm:$0xff]
      %v214 = vld [vmem:[%s1 + $0x130] sm:$0xff]
      %v215 = vld [vmem:[%s1 + $0x138] sm:$0xff]
      %v216 = vld [vmem:[%s1 + $0x140] sm:$0xff]
      %v217 = vld [vmem:[%s1 + $0x148] sm:$0xff]
      %v218 = vld [vmem:[%s1 + $0x150] sm:$0xff]
      %v219 = vld [vmem:[%s1 + $0x158] sm:$0xff]
      %v220 = vld [vmem:[%s1 + $0x160] sm:$0xff]
      %v221 = vld [vmem:[%s1 + $0x168] sm:$0xff]
      %v222 = vld [vmem:[%s1 + $0x170] sm:$0xff]
      %v223 = vld [vmem:[%s1 + $0x178] sm:$0xff]
      %v224 = vld [vmem:[%s1 + $0x180] sm:$0xff]
      %v225 = vld [vmem:[%s1 + $0x188] sm:$0xff]
      %v226 = vld [vmem:[%s1 + $0x190] sm:$0xff]
      %v227 = vld [vmem:[%s1 + $0x198] sm:$0xff]
      %v228 = vld [vmem:[%s1 + $0x1a0] sm:$0xff]
      %v229 = vld [vmem:[%s1 + $0x1a8] sm:$0xff]
      %v230 = vld [vmem:[%s1 + $0x1b0] sm:$0xff]
      %v231 = vld [vmem:[%s1 + $0x1b8] sm:$0xff]
      %v232 = vld [vmem:[%s1 + $0x1c0] sm:$0xff]
      %v233 = vld [vmem:[%s1 + $0x1c8] sm:$0xff]
      %v234 = vld [vmem:[%s1 + $0x1d0] sm:$0xff]
      %v235 = vld [vmem:[%s1 + $0x1d8] sm:$0xff]
      %v236 = vld [vmem:[%s1 + $0x1e0] sm:$0xff]
      %v237 = vld [vmem:[%s1 + $0x1e8] sm:$0xff]
      %v238 = vld [vmem:[%s1 + $0x1f0] sm:$0xff]
      %v239 = vld [vmem:[%s1 + $0x1f8] sm:$0xff]
      %v240 = vld [vmem:[%s1 + $0x200] sm:$0xff]
      %v241 = vld [vmem:[%s1 + $0x208] sm:$0xff]
      %v242 = vld [vmem:[%s1 + $0x210] sm:$0xff]
      %v243 = vld [vmem:[%s1 + $0x218] sm:$0xff]
      %v244 = vld [vmem:[%s1 + $0x220] sm:$0xff]
      %v245 = vld [vmem:[%s1 + $0x228] sm:$0xff]
      %v246 = vld [vmem:[%s1 + $0x230] sm:$0xff]
      %v247 = vld [vmem:[%s1 + $0x238] sm:$0xff]
      %v248 = vld [vmem:[%s1 + $0x240] sm:$0xff]
      %v249 = vld [vmem:[%s1 + $0x248] sm:$0xff]
      %v250 = vld [vmem:[%s1 + $0x250] sm:$0xff]
      %v251 = vld [vmem:[%s1 + $0x258] sm:$0xff]
      %v252 = vld [vmem:[%s1 + $0x260] sm:$0xff]
      %v253 = vld [vmem:[%s1 + $0x268] sm:$0xff]
      %v254 = vld [vmem:[%s1 + $0x270] sm:$0xff]
      %v255 = vld [vmem:[%s1 + $0x278] sm:$0xff]
      %v256 = vld [vmem:[%s1 + $0x280] sm:$0xff]
      %v257 = vld [vmem:[%s1 + $0x288] sm:$0xff]
      %v258 = vld [vmem:[%s1 + $0x290] sm:$0xff]
      %v259 = vld [vmem:[%s1 + $0x298] sm:$0xff]
      %v260 = vld [vmem:[%s1 + $0x2a0] sm:$0xff]
      %v261 = vld [vmem:[%s1 + $0x2a8] sm:$0xff]
      %v262 = vld [vmem:[%s1 + $0x2b0] sm:$0xff]
      %v263 = vld [vmem:[%s1 + $0x2b8] sm:$0xff]
      %v264 = vld [vmem:[%s1 + $0x2c0] sm:$0xff]
      %v265 = vld [vmem:[%s1 + $0x2c8] sm:$0xff]
      %v266 = vld [vmem:[%s1 + $0x2d0] sm:$0xff]
      %v267 = vld [vmem:[%s1 + $0x2d8] sm:$0xff]
      %v268 = vld [vmem:[%s1 + $0x2e0] sm:$0xff]
      %v269 = vld [vmem:[%s1 + $0x2e8] sm:$0xff]
      %v270 = vld [vmem:[%s1 + $0x2f0] sm:$0xff]
      %v271 = vld [vmem:[%s1 + $0x2f8] sm:$0xff]
      %v272 = vld [vmem:[%s1 + $0x300] sm:$0xff]
      %v273 = vld [vmem:[%s1 + $0x308] sm:$0xff]
      %v274 = vld [vmem:[%s2] sm:$0x1]
      %v276 = vlaneseq
      %v277 = vshrl.u32 %v276, 7
      %v278 = vsub.s32 0, %v277
      %v279 = vrot.slane %v274, %v278
      %vm281 = vcmask 130048
      %v283 = vsel %vm281, %v175, 0
      %285 = vmatprep.subr.mxu0 0.0
      %286 = vmatpush1.msra.mxu0 %v176
      %287 = vmatprep.subr.mxu0 0.0
      %288 = vmatpush1.msra.mxu0 %v177
      %289 = vmatprep.subr.mxu0 0.0
      %290 = vmatpush1.msra.mxu0 %v178
      %291 = vmatprep.subr.mxu0 0.0
      %292 = vmatpush1.msra.mxu0 %v179
      %293 = vmatprep.subr.mxu0 0.0
      %294 = vmatpush1.msra.mxu0 %v180
      %295 = vmatprep.subr.mxu0 0.0
      %296 = vmatpush1.msra.mxu0 %v181
      %297 = vmatprep.subr.mxu0 0.0
      %298 = vmatpush1.msra.mxu0 %v182
      %299 = vmatprep.subr.mxu0 0.0
      %300 = vmatpush1.msra.mxu0 %v183
      %301 = vmatprep.subr.mxu0 0.0
      %302 = vmatpush1.msra.mxu0 %v184
      %303 = vmatprep.subr.mxu0 0.0
      %304 = vmatpush1.msra.mxu0 %v185
      %305 = vmatprep.subr.mxu0 0.0
      %306 = vmatpush1.msra.mxu0 %v186
      %307 = vmatprep.subr.mxu0 0.0
      %308 = vmatpush1.msra.mxu0 %v187
      %309 = vmatprep.subr.mxu0 0.0
      %310 = vmatpush1.msra.mxu0 %v188
      %311 = vmatprep.subr.mxu0 0.0
      %312 = vmatpush1.msra.mxu0 %v189
      %313 = vmatprep.subr.mxu0 0.0
      %314 = vmatpush1.msra.mxu0 %v190
      %315 = vmatprep.subr.mxu0 0.0
      %316 = vmatpush1.msra.mxu0 %v191
      %317 = vmatprep.subr.mxu0 0.0
      %318 = vmatpush1.msra.mxu0 %v192
      %319 = vmatprep.subr.mxu0 0.0
      %320 = vmatpush1.msra.mxu0 %v193
      %321 = vmatprep.subr.mxu0 0.0
      %322 = vmatpush1.msra.mxu0 %v194
      %323 = vmatprep.subr.mxu0 0.0
      %324 = vmatpush1.msra.mxu0 %v195
      %325 = vmatprep.subr.mxu0 0.0
      %326 = vmatpush1.msra.mxu0 %v196
      %327 = vmatprep.subr.mxu0 0.0
      %328 = vmatpush1.msra.mxu0 %v197
      %329 = vmatprep.subr.mxu0 0.0
      %330 = vmatpush1.msra.mxu0 %v198
      %331 = vmatprep.subr.mxu0 0.0
      %332 = vmatpush1.msra.mxu0 %v199
      %333 = vmatprep.subr.mxu0 0.0
      %334 = vmatpush1.msra.mxu0 %v200
      %335 = vmatprep.subr.mxu0 0.0
      %336 = vmatpush1.msra.mxu0 %v201
      %337 = vmatprep.subr.mxu0 0.0
      %338 = vmatpush1.msra.mxu0 %v202
      %339 = vmatprep.subr.mxu0 0.0
      %340 = vmatpush1.msra.mxu0 %v203
      %341 = vmatprep.subr.mxu0 0.0
      %342 = vmatpush1.msra.mxu0 %v204
      %343 = vmatprep.subr.mxu0 0.0
      %344 = vmatpush1.msra.mxu0 %v205
      %345 = vmatprep.subr.mxu0 0.0
      %346 = vmatpush1.msra.mxu0 %v206
      %347 = vmatprep.subr.mxu0 0.0
      %348 = vmatpush1.msra.mxu0 %v207
      %349 = vmatprep.mubr.f32.mxu0 %v170
      %350 = vmatmul.mubr.f32.gmra.mrb[0].mxu0 %v169
      %v351 = vpop.f32.mrb[0].mxu0
      %v352 = vadd.f32 %v279, %v351
      %v353 = vpop.f32.mrb[0].mxu0
      %354 = vdwg.mxu0
      %355 = vmatprep.subr.mxu0 0.0
      %356 = vmatpush1.msra.mxu0 %v208
      %357 = vmatprep.subr.mxu0 0.0
      %358 = vmatpush1.msra.mxu0 %v209
      %359 = vmatprep.subr.mxu0 0.0
      %360 = vmatpush1.msra.mxu0 %v210
      %361 = vmatprep.subr.mxu0 0.0
      %362 = vmatpush1.msra.mxu0 %v211
      %363 = vmatprep.subr.mxu0 0.0
      %364 = vmatpush1.msra.mxu0 %v212
      %365 = vmatprep.subr.mxu0 0.0
      %366 = vmatpush1.msra.mxu0 %v213
      %367 = vmatprep.subr.mxu0 0.0
      %368 = vmatpush1.msra.mxu0 %v214
      %369 = vmatprep.subr.mxu0 0.0
      %370 = vmatpush1.msra.mxu0 %v215
      %371 = vmatprep.subr.mxu0 0.0
      %372 = vmatpush1.msra.mxu0 %v216
      %373 = vmatprep.subr.mxu0 0.0
      %374 = vmatpush1.msra.mxu0 %v217
      %375 = vmatprep.subr.mxu0 0.0
      %376 = vmatpush1.msra.mxu0 %v218
      %377 = vmatprep.subr.mxu0 0.0
      %378 = vmatpush1.msra.mxu0 %v219
      %379 = vmatprep.subr.mxu0 0.0
      %380 = vmatpush1.msra.mxu0 %v220
      %381 = vmatprep.subr.mxu0 0.0
      %382 = vmatpush1.msra.mxu0 %v221
      %383 = vmatprep.subr.mxu0 0.0
      %384 = vmatpush1.msra.mxu0 %v222
      %385 = vmatprep.subr.mxu0 0.0
      %386 = vmatpush1.msra.mxu0 %v223
      %387 = vmatprep.subr.mxu0 0.0
      %388 = vmatpush1.msra.mxu0 %v224
      %389 = vmatprep.subr.mxu0 0.0
      %390 = vmatpush1.msra.mxu0 %v225
      %391 = vmatprep.subr.mxu0 0.0
      %392 = vmatpush1.msra.mxu0 %v226
      %393 = vmatprep.subr.mxu0 0.0
      %394 = vmatpush1.msra.mxu0 %v227
      %395 = vmatprep.subr.mxu0 0.0
      %396 = vmatpush1.msra.mxu0 %v228
      %397 = vmatprep.subr.mxu0 0.0
      %398 = vmatpush1.msra.mxu0 %v229
      %399 = vmatprep.subr.mxu0 0.0
      %400 = vmatpush1.msra.mxu0 %v230
      %401 = vmatprep.subr.mxu0 0.0
      %402 = vmatpush1.msra.mxu0 %v231
      %403 = vmatprep.subr.mxu0 0.0
      %404 = vmatpush1.msra.mxu0 %v232
      %405 = vmatprep.subr.mxu0 0.0
      %406 = vmatpush1.msra.mxu0 %v233
      %407 = vmatprep.subr.mxu0 0.0
      %408 = vmatpush1.msra.mxu0 %v234
      %409 = vmatprep.subr.mxu0 0.0
      %410 = vmatpush1.msra.mxu0 %v235
      %411 = vmatprep.subr.mxu0 0.0
      %412 = vmatpush1.msra.mxu0 %v236
      %413 = vmatprep.subr.mxu0 0.0
      %414 = vmatpush1.msra.mxu0 %v237
      %415 = vmatprep.subr.mxu0 0.0
      %416 = vmatpush1.msra.mxu0 %v238
      %417 = vmatprep.subr.mxu0 0.0
      %418 = vmatpush1.msra.mxu0 %v239
      %419 = vmatprep.mubr.f32.mxu0 %v172
      %420 = vmatmul.mubr.f32.gmra.mrb[0].mxu0 %v171
      %v421 = vpop.f32.mrb[0].mxu0
      %v422 = vadd.f32 %v352, %v421
      %v423 = vpop.f32.mrb[0].mxu0
      %424 = vdwg.mxu0
      %425 = vmatprep.subr.mxu0 0.0
      %426 = vmatpush1.msra.mxu0 %v240
      %427 = vmatprep.subr.mxu0 0.0
      %428 = vmatpush1.msra.mxu0 %v241
      %429 = vmatprep.subr.mxu0 0.0
      %430 = vmatpush1.msra.mxu0 %v242
      %431 = vmatprep.subr.mxu0 0.0
      %432 = vmatpush1.msra.mxu0 %v243
      %433 = vmatprep.subr.mxu0 0.0
      %434 = vmatpush1.msra.mxu0 %v244
      %435 = vmatprep.subr.mxu0 0.0
      %436 = vmatpush1.msra.mxu0 %v245
      %437 = vmatprep.subr.mxu0 0.0
      %438 = vmatpush1.msra.mxu0 %v246
      %439 = vmatprep.subr.mxu0 0.0
      %440 = vmatpush1.msra.mxu0 %v247
      %441 = vmatprep.subr.mxu0 0.0
      %442 = vmatpush1.msra.mxu0 %v248
      %443 = vmatprep.subr.mxu0 0.0
      %444 = vmatpush1.msra.mxu0 %v249
      %445 = vmatprep.subr.mxu0 0.0
      %446 = vmatpush1.msra.mxu0 %v250
      %447 = vmatprep.subr.mxu0 0.0
      %448 = vmatpush1.msra.mxu0 %v251
      %449 = vmatprep.subr.mxu0 0.0
      %450 = vmatpush1.msra.mxu0 %v252
      %451 = vmatprep.subr.mxu0 0.0
      %452 = vmatpush1.msra.mxu0 %v253
      %453 = vmatprep.subr.mxu0 0.0
      %454 = vmatpush1.msra.mxu0 %v254
      %455 = vmatprep.subr.mxu0 0.0
      %456 = vmatpush1.msra.mxu0 %v255
      %457 = vmatprep.subr.mxu0 0.0
      %458 = vmatpush1.msra.mxu0 %v256
      %459 = vmatprep.subr.mxu0 0.0
      %460 = vmatpush1.msra.mxu0 %v257
      %461 = vmatprep.subr.mxu0 0.0
      %462 = vmatpush1.msra.mxu0 %v258
      %463 = vmatprep.subr.mxu0 0.0
      %464 = vmatpush1.msra.mxu0 %v259
      %465 = vmatprep.subr.mxu0 0.0
      %466 = vmatpush1.msra.mxu0 %v260
      %467 = vmatprep.subr.mxu0 0.0
      %468 = vmatpush1.msra.mxu0 %v261
      %469 = vmatprep.subr.mxu0 0.0
      %470 = vmatpush1.msra.mxu0 %v262
      %471 = vmatprep.subr.mxu0 0.0
      %472 = vmatpush1.msra.mxu0 %v263
      %473 = vmatprep.subr.mxu0 0.0
      %474 = vmatpush1.msra.mxu0 %v264
      %475 = vmatprep.subr.mxu0 0.0
      %476 = vmatpush1.msra.mxu0 %v265
      %477 = vmatprep.subr.mxu0 0.0
      %478 = vmatpush1.msra.mxu0 %v266
      %479 = vmatprep.subr.mxu0 0.0
      %480 = vmatpush1.msra.mxu0 %v267
      %481 = vmatprep.subr.mxu0 0.0
      %482 = vmatpush1.msra.mxu0 %v268
      %483 = vmatprep.subr.mxu0 0.0
      %484 = vmatpush1.msra.mxu0 %v269
      %485 = vmatprep.subr.mxu0 0.0
      %486 = vmatpush1.msra.mxu0 %v270
      %487 = vmatprep.subr.mxu0 0.0
      %488 = vmatpush1.msra.mxu0 %v271
      %489 = vmatprep.mubr.f32.mxu0 %v174
      %490 = vmatmul.mubr.f32.gmra.mrb[0].mxu0 %v173
      %v491 = vpop.f32.mrb[0].mxu0
      %v492 = vadd.f32 %v422, %v491
      %v493 = vpop.f32.mrb[0].mxu0
      %494 = vdwg.mxu0
      %495 = vmatprep.subr.mxu0 0.0
      %496 = vmatpush1.msra.mxu0 %v272
      %497 = vmatprep.subr.mxu0 0.0
      %498 = vmatpush1.msra.mxu0 %v273
      %499 = vmatprep.subr.mxu0 0.0
      %500 = vmatpush1.msra.mxu0 0.0
      %501 = vmatprep.subr.mxu0 0.0
      %502 = vmatpush1.msra.mxu0 0.0
      %503 = vmatprep.subr.mxu0 0.0
      %504 = vmatpush1.msra.mxu0 0.0
      %505 = vmatprep.subr.mxu0 0.0
      %506 = vmatpush1.msra.mxu0 0.0
      %507 = vmatprep.subr.mxu0 0.0
      %508 = vmatpush1.msra.mxu0 0.0
      %509 = vmatprep.subr.mxu0 0.0
      %510 = vmatpush1.msra.mxu0 0.0
      %511 = vmatprep.subr.mxu0 0.0
      %512 = vmatpush1.msra.mxu0 0.0
      %513 = vmatprep.subr.mxu0 0.0
      %514 = vmatpush1.msra.mxu0 0.0
      %515 = vmatprep.subr.mxu0 0.0
      %516 = vmatpush1.msra.mxu0 0.0
      %517 = vmatprep.subr.mxu0 0.0
      %518 = vmatpush1.msra.mxu0 0.0
      %519 = vmatprep.subr.mxu0 0.0
      %520 = vmatpush1.msra.mxu0 0.0
      %521 = vmatprep.subr.mxu0 0.0
      %522 = vmatpush1.msra.mxu0 0.0
      %523 = vmatprep.subr.mxu0 0.0
      %524 = vmatpush1.msra.mxu0 0.0
      %525 = vmatprep.subr.mxu0 0.0
      %526 = vmatpush1.msra.mxu0 0.0
      %527 = vmatprep.subr.mxu0 0.0
      %528 = vmatpush1.msra.mxu0 0.0
      %529 = vmatprep.subr.mxu0 0.0
      %530 = vmatpush1.msra.mxu0 0.0
      %531 = vmatprep.subr.mxu0 0.0
      %532 = vmatpush1.msra.mxu0 0.0
      %533 = vmatprep.subr.mxu0 0.0
      %534 = vmatpush1.msra.mxu0 0.0
      %535 = vmatprep.subr.mxu0 0.0
      %536 = vmatpush1.msra.mxu0 0.0
      %537 = vmatprep.subr.mxu0 0.0
      %538 = vmatpush1.msra.mxu0 0.0
      %539 = vmatprep.subr.mxu0 0.0
      %540 = vmatpush1.msra.mxu0 0.0
      %541 = vmatprep.subr.mxu0 0.0
      %542 = vmatpush1.msra.mxu0 0.0
      %543 = vmatprep.subr.mxu0 0.0
      %544 = vmatpush1.msra.mxu0 0.0
      %545 = vmatprep.subr.mxu0 0.0
      %546 = vmatpush1.msra.mxu0 0.0
      %547 = vmatprep.subr.mxu0 0.0
      %548 = vmatpush1.msra.mxu0 0.0
      %549 = vmatprep.subr.mxu0 0.0
      %550 = vmatpush1.msra.mxu0 0.0
      %551 = vmatprep.subr.mxu0 0.0
      %552 = vmatpush1.msra.mxu0 0.0
      %553 = vmatprep.subr.mxu0 0.0
      %554 = vmatpush1.msra.mxu0 0.0
      %555 = vmatprep.subr.mxu0 0.0
      %556 = vmatpush1.msra.mxu0 0.0
      %557 = vmatprep.subr.mxu0 0.0
      %558 = vmatpush1.msra.mxu0 0.0
      %559 = vmatprep.mubr.f32.mxu0 0.0
      %560 = vmatmul.mubr.f32.gmra.mrb[0].mxu0 %v283
      %v561 = vpop.f32.mrb[0].mxu0
      %v562 = vadd.f32 %v492, %v561
      %v563 = vpop.f32.mrb[0].mxu0
      %564 = vdwg.mxu0
      %v565 = vmax.f32 %v562, 0.0
      %vm566 = vcmask 15360
      %v567 = vsel %vm566, %v565, -inf
      %568 = vmax.xlane.f32.xlu0 %v567
      %v569 = vpop.xlane.xlu0 %568
      %v570 = vsub.f32 %v565, %v569
      %v571 = vmul.f32 %v570, 1.442695
      %v572 = vpow.pop %v571
      %v573 = vsel %vm566, %v572, 0.0
      %574 = vadd.xlane.f32.xlu0 %v573
      %v575 = vpop.xlane.xlu0 %574
      %v576 = vlog2.pop %v575
      %v577 = vmul.f32 %v576, 0.6931472
      %v578 = vadd.f32 %v577, %v569
      %v579 = vsub.f32 %v565, %v578
      %580 = vst.msk [vmem:[%s168] sm:$0xff] %vm566, %v579
      %p581 = scmp.lt.s32.totalorder %s14, 1
      %s582 = scalar_select %p581, %s14, 1
      %s583 = smul.addr %s582, 8
      %s584 = scalar_lea.vmem %s3, %s583
      // Predicated region
      $region33: #{cnn_model_forward.1} parent=31 // pred_check
        %p585 = pneg %p100
      $region34: #{cnn_model_forward.1} parent=31 // pred_check_branch
        %587 = sbr.rel (%p585) target = $region36
      $region35: #{cnn_model_forward.1} parent=31 // pred_region
        _
      $region36: #{cnn_model_forward.1} parent=31 // pred_fallthru
        _
    $region32: #{cnn_model_forward.1} parent=5 // pred_fallthru
      _
    %p588 = scmp.le.s32.totalorder 2, %s9
    // Predicated region
    $region37: #{cnn_model_forward.1} parent=5 // pred_check
      %p589 = pneg %p588
    $region38: #{cnn_model_forward.1} parent=5 // pred_check_branch
      %591 = sbr.rel (%p589) target = $region40
    $region39: #{cnn_model_forward.1} parent=5 // pred_region
      %s592 = ssub.s32 %s9, 2
      // Predicated region
      $region41: #{cnn_model_forward.1} parent=39 // pred_check
        %p593 = pneg %p106
      $region42: #{cnn_model_forward.1} parent=39 // pred_check_branch
        %595 = sbr.rel (%p593) target = $region44
      $region43: #{cnn_model_forward.1} parent=39 // pred_region
        %p596 = scmp.lt.s32.totalorder %s15, 1
        %s597 = scalar_select %p596, %s15, 1
        %s598 = smul.addr %s597, 8
        %s599 = scalar_lea.vmem %s3, %s598
      $region44: #{cnn_model_forward.1} parent=39 // pred_fallthru
        _
    $region40: #{cnn_model_forward.1} parent=5 // pred_fallthru
      _
  $region6: #{cnn_model_forward.1} parent=0 // loop_footer
    %s13 = sadd.s32 1, %s9
  $region7: #{cnn_model_forward.1} parent=0 // loop_footer_branch
    %8 = sbr.rel target = $region3
  $region8: #{cnn_model_forward.1} parent=0 // loop_exit
    _

</llo_original>
